<compile_context>
chip_gen: v5e
topology: v5e:2x2
jax: 0.10.0
libtpu: 0.0.40
codegen_flags: <defaults>
</compile_context>

<pallas_src>
import functools

import jax
import jax.numpy as jnp
from jax.experimental import pallas as pl
from jax.experimental.pallas import tpu as pltpu


def _round_up(n, m):
    return (n + m - 1) // m * m


def _choose_tb(batch, block_b):
    """Batch tile: multiple of 16 (bf16 sublane packing), capped at block_b,
    and capped at ~half the batch so moderate/large B yields >=2 grid steps
    (lets v7x's two TensorCores both work under "parallel")."""
    half = -(-batch // 2)
    tb = min(block_b, _round_up(half, 16), _round_up(batch, 8))
    return max(tb, 8)


def _mlp_kernel(x_ref, w1_ref, b1_ref, w2_ref, b2_ref, o_ref):
    # Cast the f32 x tile to bf16 in-kernel (VPU slack in a mem-bound kernel).
    xb = x_ref[...].astype(jnp.bfloat16)
    # l1: x @ W1 -> f32 MXU accumulator (bf16 operands).
    h = jnp.dot(xb, w1_ref[...], preferred_element_type=jnp.float32)
    # bias + ReLU in f32 (b1 is (1, HIDDEN) -> broadcast over batch rows).
    h = jnp.maximum(h + b1_ref[...], 0.0)
    # l2: bf16 only for the MXU operand; accumulate in f32.
    out = jnp.dot(h.astype(w2_ref.dtype), w2_ref[...],
                  preferred_element_type=jnp.float32)
    o_ref[...] = (out + b2_ref[...]).astype(o_ref.dtype)


@functools.partial(jax.jit, static_argnames=("block_b",))
def neural_net_forward(x, w1, b1, w2, b2, *, block_b=1024):
    """Fused Linear -> ReLU -> Linear forward pass.

    x : [B, IN] float32 (unpadded)
    w1: [IN, HIDDEN]  bf16 (use prepare_params; transposed vs PyTorch [HIDDEN, IN])
    b1: [1, HIDDEN] or [HIDDEN] float32
    w2: [HIDDEN, OUT] bf16 (transposed vs PyTorch [OUT, HIDDEN])
    b2: [1, OUT] or [OUT] float32
    returns [B, OUT] float32
    """
    B, in_dim = x.shape
    hid_dim = w1.shape[1]
    out_dim = w2.shape[1]

    # These are no-op converts when params were prepared once at init.
    w1 = w1.astype(jnp.bfloat16)
    w2 = w2.astype(jnp.bfloat16)
    b1 = b1.reshape(1, hid_dim).astype(jnp.float32)
    b2 = b2.reshape(1, out_dim).astype(jnp.float32)

    tb = _choose_tb(B, block_b)
    grid = (pl.cdiv(B, tb),)

    return pl.pallas_call(
        _mlp_kernel,
        out_shape=jax.ShapeDtypeStruct((B, out_dim), jnp.float32),
        grid=grid,
        in_specs=[
            pl.BlockSpec((tb, in_dim), lambda i: (i, 0)),        # x tile (f32)
            pl.BlockSpec((in_dim, hid_dim), lambda i: (0, 0)),   # W1 (resident)
            pl.BlockSpec((1, hid_dim), lambda i: (0, 0)),        # b1 (resident)
            pl.BlockSpec((hid_dim, out_dim), lambda i: (0, 0)),  # W2 (resident)
            pl.BlockSpec((1, out_dim), lambda i: (0, 0)),        # b2 (resident)
        ],
        out_specs=pl.BlockSpec((tb, out_dim), lambda i: (i, 0)),
        compiler_params=pltpu.CompilerParams(
            dimension_semantics=("parallel",),
        ),
    )(x, w1, b1, w2, b2)


def init_params(key, input_size, hidden_size, classes):
    """Deterministic init mirroring nn.Linear's U(-1/sqrt(fan_in), 1/sqrt(fan_in)).

    Returns f32 params in "kernel" layout: W[in, out], b[1, out]."""
    out_size = classes if classes > 2 else 1
    k1, k2, k3, k4 = jax.random.split(key, 4)
    lim1 = 1.0 / jnp.sqrt(jnp.float32(input_size))
    lim2 = 1.0 / jnp.sqrt(jnp.float32(hidden_size))
    w1 = jax.random.uniform(k1, (input_size, hidden_size), jnp.float32, -lim1, lim1)
    b1 = jax.random.uniform(k2, (1, hidden_size), jnp.float32, -lim1, lim1)
    w2 = jax.random.uniform(k3, (hidden_size, out_size), jnp.float32, -lim2, lim2)
    b2 = jax.random.uniform(k4, (1, out_size), jnp.float32, -lim2, lim2)
    return w1, b1, w2, b2


def prepare_params(w1, b1, w2, b2):
    """One-time (hoisted) conversion of weights to bf16 MXU operands."""
    return (w1.astype(jnp.bfloat16), b1.astype(jnp.float32),
            w2.astype(jnp.bfloat16), b2.astype(jnp.float32))


if __name__ == "__main__":
    # NeuralNet(input=32, hidden=64, classes=10)
    B, INPUT, HIDDEN, CLASSES = 8, 32, 64, 10

    key = jax.random.PRNGKey(0)
    kx, kp = jax.random.split(key)
    x = jax.random.normal(kx, (B, INPUT), jnp.float32)
    w1, b1, w2, b2 = init_params(kp, INPUT, HIDDEN, CLASSES)
    w1p, b1p, w2p, b2p = prepare_params(w1, b1, w2, b2)

    out = neural_net_forward(x, w1p, b1p, w2p, b2p)
    out = jax.block_until_ready(out)
    assert out.shape == (B, CLASSES)

    # Reference with matching bf16 operand casts (f32 accumulate).
    xb = x.astype(jnp.bfloat16).astype(jnp.float32)
    w1b = w1.astype(jnp.bfloat16).astype(jnp.float32)
    w2b = w2.astype(jnp.bfloat16).astype(jnp.float32)
    h = jnp.maximum(xb @ w1b + b1, 0.0)
    ref = h.astype(jnp.bfloat16).astype(jnp.float32) @ w2b + b2
    assert jnp.allclose(out, ref, atol=1e-2, rtol=1e-2), float(
        jnp.max(jnp.abs(out - ref)))

    # Sanity-check against the pure-f32 reference with a loose tolerance.
    ref_f32 = jnp.maximum(x @ w1 + b1, 0.0) @ w2 + b2
    assert jnp.allclose(out, ref_f32, atol=5e-2, rtol=5e-2)

    print("KERNEL_OK")
</pallas_src>

<mosaic_0001>
module attributes {stable_mosaic.version = 11 : i64} {
  func.func @_mlp_kernel(%arg0: i32, %arg1: memref<8x32xf32, #tpu.memory_space<vmem>>, %arg2: memref<32x64xbf16, #tpu.memory_space<vmem>>, %arg3: memref<1x64xf32, #tpu.memory_space<vmem>>, %arg4: memref<64x10xbf16, #tpu.memory_space<vmem>>, %arg5: memref<1x10xf32, #tpu.memory_space<vmem>>, %arg6: memref<8x10xf32, #tpu.memory_space<vmem>>) attributes {dimension_semantics = [#tpu.dimension_semantics<parallel>], iteration_bounds = array<i64: 1>, scalar_prefetch = 0 : i64, scratch_operands = 0 : i64, tpu.core_type = #tpu.core_type<tc>, window_params = [{transform_indices = @transform_0, window_bounds = array<i64: 8, 32>}, {pipeline_mode = #tpu.pipeline_mode<synchronous>, transform_indices = @transform_1, window_bounds = array<i64: 32, 64>}, {pipeline_mode = #tpu.pipeline_mode<synchronous>, transform_indices = @transform_2, window_bounds = array<i64: 1, 64>}, {pipeline_mode = #tpu.pipeline_mode<synchronous>, transform_indices = @transform_3, window_bounds = array<i64: 64, 10>}, {pipeline_mode = #tpu.pipeline_mode<synchronous>, transform_indices = @transform_4, window_bounds = array<i64: 1, 10>}, {transform_indices = @transform_5, window_bounds = array<i64: 8, 10>}]} {
    %c0 = arith.constant 0 : index
    %c0_0 = arith.constant 0 : index
    %0 = vector.load %arg1[%c0, %c0_0] : memref<8x32xf32, #tpu.memory_space<vmem>>, vector<8x32xf32>
    %1 = arith.truncf %0 : vector<8x32xf32> to vector<8x32xbf16>
    %c0_1 = arith.constant 0 : index
    %c0_2 = arith.constant 0 : index
    %2 = vector.load %arg2[%c0_1, %c0_2] : memref<32x64xbf16, #tpu.memory_space<vmem>>, vector<32x64xbf16>
    %cst = arith.constant dense<0.000000e+00> : vector<8x64xf32>
    %3 = tpu.matmul %1, %2, %cst {dimension_numbers = #tpu.dot_dimension_numbers<[1], [0], [0], [1], [0, 0, 1, 1], [], []>} : vector<8x32xbf16>, vector<32x64xbf16>, vector<8x64xf32> -> vector<8x64xf32>
    %c0_3 = arith.constant 0 : index
    %c0_4 = arith.constant 0 : index
    %4 = vector.load %arg3[%c0_3, %c0_4] : memref<1x64xf32, #tpu.memory_space<vmem>>, vector<1x64xf32>
    %5 = vector.broadcast %4 : vector<1x64xf32> to vector<8x64xf32>
    %6 = arith.addf %3, %5 : vector<8x64xf32>
    %cst_5 = arith.constant 0.000000e+00 : f32
    %7 = vector.broadcast %cst_5 : f32 to vector<8x64xf32>
    %8 = arith.maximumf %6, %7 : vector<8x64xf32>
    %9 = arith.truncf %8 : vector<8x64xf32> to vector<8x64xbf16>
    %c0_6 = arith.constant 0 : index
    %c0_7 = arith.constant 0 : index
    %10 = vector.load %arg4[%c0_6, %c0_7] : memref<64x10xbf16, #tpu.memory_space<vmem>>, vector<64x10xbf16>
    %cst_8 = arith.constant dense<0.000000e+00> : vector<8x10xf32>
    %11 = tpu.matmul %9, %10, %cst_8 {dimension_numbers = #tpu.dot_dimension_numbers<[1], [0], [0], [1], [0, 0, 1, 1], [], []>} : vector<8x64xbf16>, vector<64x10xbf16>, vector<8x10xf32> -> vector<8x10xf32>
    %c0_9 = arith.constant 0 : index
    %c0_10 = arith.constant 0 : index
    %12 = vector.load %arg5[%c0_9, %c0_10] : memref<1x10xf32, #tpu.memory_space<vmem>>, vector<1x10xf32>
    %13 = vector.broadcast %12 : vector<1x10xf32> to vector<8x10xf32>
    %14 = arith.addf %11, %13 : vector<8x10xf32>
    %c0_11 = arith.constant 0 : index
    %c0_12 = arith.constant 0 : index
    %15 = vector.load %arg6[%c0_11, %c0_12] : memref<8x10xf32, #tpu.memory_space<vmem>>, vector<8x10xf32>
    tpu.vector_store %arg6[%c0_11, %c0_12], %14 {strides = array<i32>} : memref<8x10xf32, #tpu.memory_space<vmem>>, vector<8x10xf32>,
    return
  }
  func.func @transform_0(%arg0: i32) -> (i32, i32) {
    %c0_i32 = arith.constant 0 : i32
    %c0_i32_0 = arith.constant 0 : i32
    return %arg0, %c0_i32 : i32, i32
  }
  func.func @transform_1(%arg0: i32) -> (i32, i32) {
    %c0_i32 = arith.constant 0 : i32
    %c0_i32_0 = arith.constant 0 : i32
    %c0_i32_1 = arith.constant 0 : i32
    return %c0_i32, %c0_i32_0 : i32, i32
  }
  func.func @transform_2(%arg0: i32) -> (i32, i32) {
    %c0_i32 = arith.constant 0 : i32
    %c0_i32_0 = arith.constant 0 : i32
    %c0_i32_1 = arith.constant 0 : i32
    return %c0_i32, %c0_i32_0 : i32, i32
  }
  func.func @transform_3(%arg0: i32) -> (i32, i32) {
    %c0_i32 = arith.constant 0 : i32
    %c0_i32_0 = arith.constant 0 : i32
    %c0_i32_1 = arith.constant 0 : i32
    return %c0_i32, %c0_i32_0 : i32, i32
  }
  func.func @transform_4(%arg0: i32) -> (i32, i32) {
    %c0_i32 = arith.constant 0 : i32
    %c0_i32_0 = arith.constant 0 : i32
    %c0_i32_1 = arith.constant 0 : i32
    return %c0_i32, %c0_i32_0 : i32, i32
  }
  func.func @transform_5(%arg0: i32) -> (i32, i32) {
    %c0_i32 = arith.constant 0 : i32
    %c0_i32_0 = arith.constant 0 : i32
    return %arg0, %c0_i32 : i32, i32
  }
}

</mosaic_0001>

<llo_original>
// kernel: neural_net_forward.1
$region0: #{neural_net_forward.1}
  #allocation0 [shape = 'u32[]', space=smem, size = 0x4, offset = 0x4, fixed_abs, tag = 'smem constant byte address 0x4 - core index']
  #allocation1 [shape = 'u32[72,128]{1,0:T(1,128)}', space=vmem, size = 0x9000, scoped, tag = 'internal scratch']
  %s0 = inlined_call_operand.vmem [shape: f32[8,32], index: 0, kind: input, shape index: {}]
  %s1 = inlined_call_operand.vmem [shape: bf16[32,64], index: 1, kind: input, shape index: {}]
  %s2 = inlined_call_operand.vmem [shape: f32[1,64], index: 2, kind: input, shape index: {}]
  %s3 = inlined_call_operand.vmem [shape: bf16[64,10], index: 3, kind: input, shape index: {}]
  %s4 = inlined_call_operand.vmem [shape: f32[1,10], index: 4, kind: input, shape index: {}]
  %s5 = inlined_call_operand.hbm [shape: f32[8,10], index: 5, kind: output, shape index: {}]
  %s6 = sld [smem:[#allocation0]]
  $region30: #{neural_net_forward.1} parent=0
    _
  %s8 = ssub.s32 1, %s6
  %s9 = scalar_select 0, %s8, %s6
  $region1: #{neural_net_forward.1} parent=0
    #allocation2 [shape = 'u8[4096]{0}', space=vmem, size = 0x1000, scoped, tag = 'output window, operand 0, single buffered']
    #allocation3 [shape = 's32[1]{0}', space=sflag, size = 0x4, scoped, tag = 'scoped memory for neural_net_forward.1']
    %10 = vsyncpa [#allocation3], 0
    // Predicated region
    $region2: #{neural_net_forward.1} parent=1 // pred_check
      _
    $region3: #{neural_net_forward.1} parent=1 // pred_check_branch
      %12 = sbr.rel (0) target = $region5
    $region4: #{neural_net_forward.1} parent=1 // pred_region
      _
    $region5: #{neural_net_forward.1} parent=1 // pred_fallthru
      _
    // Predicated region
    $region6: #{neural_net_forward.1} parent=1 // pred_check
      _
    $region7: #{neural_net_forward.1} parent=1 // pred_check_branch
      %14 = sbr.rel (0) target = $region9
    $region8: #{neural_net_forward.1} parent=1 // pred_region
      _
    $region9: #{neural_net_forward.1} parent=1 // pred_fallthru
      _
    // Predicated region
    $region10: #{neural_net_forward.1} parent=1 // pred_check
      _
    $region11: #{neural_net_forward.1} parent=1 // pred_check_branch
      %16 = sbr.rel (0) target = $region13
    $region12: #{neural_net_forward.1} parent=1 // pred_region
      _
    $region13: #{neural_net_forward.1} parent=1 // pred_fallthru
      _
    // Predicated region
    $region14: #{neural_net_forward.1} parent=1 // pred_check
      _
    $region15: #{neural_net_forward.1} parent=1 // pred_check_branch
      %18 = sbr.rel (0) target = $region17
    $region16: #{neural_net_forward.1} parent=1 // pred_region
      _
    $region17: #{neural_net_forward.1} parent=1 // pred_fallthru
      _
    // Predicated region
    $region18: #{neural_net_forward.1} parent=1 // pred_check
      _
    $region19: #{neural_net_forward.1} parent=1 // pred_check_branch
      %20 = sbr.rel (0) target = $region21
    $region20: #{neural_net_forward.1} parent=1 // pred_region
      _
    $region21: #{neural_net_forward.1} parent=1 // pred_fallthru
      _
    %v22 = vld [vmem:[%s0] sm:$0xff]
    %v23 = vpack.c.bf16 %v22, %v22
    %v24 = vld [vmem:[%s1] sm:$0xf]
    %v25 = vld [vmem:[%s1 + $0x4] sm:$0xf]
    %v26 = vld [vmem:[%s1 + $0x8] sm:$0xf]
    %v27 = vld [vmem:[%s1 + $0xc] sm:$0xf]
    %v28 = vld [vmem:[%s2] sm:$0x1]
    %v30 = vperm.slane %v28, 0
    %v36 = vunpack.c.l.b16 %v24
    %v37 = vunpack.c.l.b16 %v25
    %v38 = vunpack.c.l.b16 %v26
    %v39 = vunpack.c.l.b16 %v27
    %v40 = vpack.c.b16 %v37, %v36
    %v41 = vpack.c.b16 %v39, %v38
    %vm44 = vcmask 261120
    %v46 = vsel %vm44, %v23, 0
    %48 = vmatpush.bf16.msra.mxu0 0
    %49 = vmatpush.bf16.msra.mxu0 0
    %50 = vmatpush.bf16.msra.mxu0 0
    %51 = vmatpush.bf16.msra.mxu0 0
    %52 = vmatpush.bf16.msra.mxu0 0
    %53 = vmatpush.bf16.msra.mxu0 0
    %54 = vmatpush.bf16.msra.mxu0 %v41
    %55 = vmatpush.bf16.msra.mxu0 %v40
    %56 = vmatmul.bf16.gmra.mxu0 %v46
    %v57 = vpop.f32.mrf.mxu0
    %v58 = vadd.f32 %v30, %v57
    %v59 = vpop.f32.mrf.mxu0
    %60 = vdwg.mxu0
    %v61 = vmax.f32 %v58, 0.0
    %v62 = vpack.c.bf16 %v61, %v61
    %v63 = vld [vmem:[%s3] sm:$0xf]
    %v64 = vld [vmem:[%s3 + $0x4] sm:$0xf]
    %v65 = vld [vmem:[%s3 + $0x8] sm:$0xf]
    %v66 = vld [vmem:[%s3 + $0xc] sm:$0xf]
    %v67 = vld [vmem:[%s3 + $0x10] sm:$0xf]
    %v68 = vld [vmem:[%s3 + $0x14] sm:$0xf]
    %v69 = vld [vmem:[%s3 + $0x18] sm:$0xf]
    %v70 = vld [vmem:[%s3 + $0x1c] sm:$0xf]
    %v71 = vld [vmem:[%s4] sm:$0x1]
    %v73 = vperm.slane %v71, 0
    %v83 = vunpack.c.l.b16 %v63
    %v84 = vunpack.c.l.b16 %v64
    %v85 = vunpack.c.l.b16 %v65
    %v86 = vunpack.c.l.b16 %v66
    %v87 = vunpack.c.l.b16 %v67
    %v88 = vunpack.c.l.b16 %v68
    %v89 = vunpack.c.l.b16 %v69
    %v90 = vunpack.c.l.b16 %v70
    %v91 = vpack.c.b16 %v84, %v83
    %v92 = vpack.c.b16 %v86, %v85
    %v93 = vpack.c.b16 %v88, %v87
    %v94 = vpack.c.b16 %v90, %v89
    %vm99 = vcmask 523264
    %v101 = vsel %vm99, %v62, 0
    %103 = vmatpush.bf16.msra.mxu0 0
    %104 = vmatpush.bf16.msra.mxu0 0
    %105 = vmatpush.bf16.msra.mxu0 0
    %106 = vmatpush.bf16.msra.mxu0 0
    %107 = vmatpush.bf16.msra.mxu0 %v94
    %108 = vmatpush.bf16.msra.mxu0 %v93
    %109 = vmatpush.bf16.msra.mxu0 %v92
    %110 = vmatpush.bf16.msra.mxu0 %v91
    %111 = vmatmul.bf16.gmra.mxu0 %v101
    %v112 = vpop.f32.mrf.mxu0
    %v113 = vadd.f32 %v73, %v112
    %v114 = vpop.f32.mrf.mxu0
    %115 = vdwg.mxu0
    %vm116 = vcmask 80896
    %117 = vst.msk [vmem:[#allocation2] sm:$0xff] %vm116, %v113
    // Predicated region
    $region22: #{neural_net_forward.1} parent=1 // pred_check
      _
    $region23: #{neural_net_forward.1} parent=1 // pred_check_branch
      %119 = sbr.rel (0) target = $region25
    $region24: #{neural_net_forward.1} parent=1 // pred_region
      %121 = vsyncadd [#allocation3], 0
      %s123 = sshll.u32 [#allocation2], 4
      %s124 = int_to_ptr.vmem [resolvable:$true] %s123
      %s125 = sshll.u32 %s5, 4
      %s126 = int_to_ptr.hbm [resolvable:$true] %s125
      %128 = dma.vmem_to_hbm [thread:$0]  %s124, 128, %s126, [#allocation3]
    $region25: #{neural_net_forward.1} parent=1 // pred_fallthru
      _
    // Predicated region
    $region26: #{neural_net_forward.1} parent=1 // pred_check
      _
    $region27: #{neural_net_forward.1} parent=1 // pred_check_branch
      %130 = sbr.rel (0) target = $region29
    $region28: #{neural_net_forward.1} parent=1 // pred_region
      %132 = dma.done [#allocation3], 128
    $region29: #{neural_net_forward.1} parent=1 // pred_fallthru
      _
    %133 = vsyncpa [#allocation3], 1

</llo_original>
